<compile_context>
chip_gen: v7x
topology: tpu7x:2x2x1
jax: 0.10.0
libtpu: 0.0.40
codegen_flags: <defaults>
</compile_context>

<pallas_src>
import jax
import jax.numpy as jnp
from jax.experimental import pallas as pl
from jax.experimental.pallas import tpu as pltpu

LANE = 128
ROW_TILE = 256   # rows of A / output per grid step (multiple of 8, MXU friendly)
K_TILE = 256     # source-node (reduction) tile       (multiple of 128)


def _round_up(v, m):
    return ((v + m - 1) // m) * m


# --------------------------------------------------------------------------- #
# Kernel 1: per-node feature transform (fused x @ [Wl | Wr], bias folded in).  #
#   hl  = x @ Wl            (bf16, consumed by the aggregation matmul)         #
#   hrb = x @ Wr + b        (f32, added once in the epilogue of kernel 2)      #
# --------------------------------------------------------------------------- #
def _feat_kernel(x_ref, w_ref, b_ref, hl_ref, hrb_ref):
    h = jnp.dot(x_ref[...], w_ref[...], preferred_element_type=jnp.float32)
    ipad = hl_ref.shape[-1]
    hl_ref[...] = h[:, :ipad].astype(hl_ref.dtype)
    hrb_ref[...] = h[:, ipad:] + b_ref[...]


# --------------------------------------------------------------------------- #
# Kernel 2: mean aggregation  A @ hl  (tiled K-reduction) + root term + ELU.   #
# --------------------------------------------------------------------------- #
def _agg_elu_kernel(a_ref, hl_ref, hrb_ref, o_ref, acc_ref):
    k = pl.program_id(1)

    @pl.when(k == 0)
    def _():
        acc_ref[...] = jnp.zeros_like(acc_ref)

    acc_ref[...] += jnp.dot(a_ref[...], hl_ref[...],
                            preferred_element_type=jnp.float32)

    @pl.when(k == pl.num_programs(1) - 1)
    def _():
        out = acc_ref[...] + hrb_ref[...]
        # ELU(alpha=1): x if x > 0 else exp(x) - 1   (f32 epilogue)
        o_ref[...] = jnp.where(out > 0, out, jnp.expm1(out)).astype(o_ref.dtype)


def block_sage_sq(x, edge_index, w_l, b_l, w_r):
    """Forward of blockSAGEsq. Returns (elu(SAGEConv(x, edge_index)), edge_index)."""
    n, hidden = x.shape
    inner = w_l.shape[0]

    n_pad = _round_up(n, max(ROW_TILE, K_TILE))
    i_pad = _round_up(inner, LANE)
    tm = min(ROW_TILE, n_pad)
    tk = min(K_TILE, n_pad)

    # ---- glue (plain JAX): dense row-normalized adjacency (mean operator) ----
    src = edge_index[0]
    dst = edge_index[1]
    adj = jnp.zeros((n_pad, n_pad), jnp.float32).at[dst, src].add(1.0)
    deg = adj.sum(axis=1, keepdims=True)
    adj = (adj / jnp.maximum(deg, 1.0)).astype(jnp.bfloat16)   # zero-degree rows stay 0

    x_pad = jnp.zeros((n_pad, hidden), jnp.float32).at[:n, :].set(
        x.astype(jnp.float32)).astype(jnp.bfloat16)

    # Stack padded [Wl | Wr] -> one lane-dense [H, 2*i_pad] weight matrix.
    wl_pad = jnp.zeros((hidden, i_pad), jnp.float32).at[:, :inner].set(
        w_l.T.astype(jnp.float32))
    wr_pad = jnp.zeros((hidden, i_pad), jnp.float32).at[:, :inner].set(
        w_r.T.astype(jnp.float32))
    w_cat = jnp.concatenate([wl_pad, wr_pad], axis=1).astype(jnp.bfloat16)
    b_pad = jnp.zeros((1, i_pad), jnp.float32).at[:, :inner].set(
        b_l.reshape(1, inner).astype(jnp.float32))

    # ---- kernel 1: feature transform ----------------------------------------
    hl, hrb = pl.pallas_call(
        _feat_kernel,
        out_shape=(jax.ShapeDtypeStruct((n_pad, i_pad), jnp.bfloat16),
                   jax.ShapeDtypeStruct((n_pad, i_pad), jnp.float32)),
        grid=(n_pad // tm,),
        in_specs=[
            pl.BlockSpec((tm, hidden), lambda i: (i, 0)),
            pl.BlockSpec((hidden, 2 * i_pad), lambda i: (0, 0)),
            pl.BlockSpec((1, i_pad), lambda i: (0, 0)),
        ],
        out_specs=(pl.BlockSpec((tm, i_pad), lambda i: (i, 0)),
                   pl.BlockSpec((tm, i_pad), lambda i: (i, 0))),
        compiler_params=pltpu.CompilerParams(
            dimension_semantics=("parallel",)),
    )(x_pad, w_cat, b_pad)

    # ---- kernel 2: tiled mean aggregation + root term + ELU -----------------
    out = pl.pallas_call(
        _agg_elu_kernel,
        out_shape=jax.ShapeDtypeStruct((n_pad, i_pad), jnp.float32),
        grid=(n_pad // tm, n_pad // tk),
        in_specs=[
            pl.BlockSpec((tm, tk), lambda i, k: (i, k)),      # A tile
            pl.BlockSpec((tk, i_pad), lambda i, k: (k, 0)),   # hl tile (reduction)
            pl.BlockSpec((tm, i_pad), lambda i, k: (i, 0)),   # root term (resident)
        ],
        out_specs=pl.BlockSpec((tm, i_pad), lambda i, k: (i, 0)),
        scratch_shapes=[pltpu.VMEM((tm, i_pad), jnp.float32)],
        compiler_params=pltpu.CompilerParams(
            dimension_semantics=("parallel", "arbitrary")),
    )(adj, hl, hrb)

    return out[:n, :inner], edge_index


def _reference(x, edge_index, w_l, b_l, w_r):
    """Plain-JAX f32 reference mirroring torch_geometric SAGEConv + F.elu."""
    n = x.shape[0]
    src, dst = edge_index[0], edge_index[1]
    summed = jnp.zeros((n, x.shape[1]), jnp.float32).at[dst].add(x[src])
    cnt = jnp.zeros((n, 1), jnp.float32).at[dst].add(1.0)
    agg = summed / jnp.maximum(cnt, 1.0)
    out = agg @ w_l.T + b_l + x @ w_r.T
    return jnp.where(out > 0, out, jnp.expm1(out))


if __name__ == "__main__":
    # Small shapes implied by the module: N nodes, hidden features, inner out dim.
    N, HIDDEN, INNER, E = 16, 32, 16, 48

    key = jax.random.PRNGKey(0)
    k_x, k_src, k_dst, k_wl, k_wr, k_b = jax.random.split(key, 6)

    x = jax.random.normal(k_x, (N, HIDDEN), dtype=jnp.float32)
    edge_index = jnp.stack([
        jax.random.randint(k_src, (E,), 0, N, dtype=jnp.int32),
        jax.random.randint(k_dst, (E,), 0, N, dtype=jnp.int32),
    ], axis=0)

    # SAGEConv params: lin_l [I,H] with bias, lin_r [I,H] no bias.
    w_l = jax.random.normal(k_wl, (INNER, HIDDEN), dtype=jnp.float32) * 0.1
    w_r = jax.random.normal(k_wr, (INNER, HIDDEN), dtype=jnp.float32) * 0.1
    b_l = jax.random.normal(k_b, (INNER,), dtype=jnp.float32) * 0.1

    out, ei = block_sage_sq(x, edge_index, w_l, b_l, w_r)
    out = jax.block_until_ready(out)

    ref = _reference(x, edge_index, w_l, b_l, w_r)
    assert out.shape == (N, INNER)
    # bf16 MXU inputs (A, x, W) with f32 accumulation -> loosened tolerance.
    assert jnp.allclose(out, ref, atol=3e-2, rtol=3e-2), "mismatch vs reference"

    print("KERNEL_OK")
</pallas_src>

<mosaic_0001>
module attributes {stable_mosaic.version = 11 : i64} {
  func.func @_feat_kernel(%arg0: i32, %arg1: memref<256x32xbf16, #tpu.memory_space<vmem>>, %arg2: memref<32x256xbf16, #tpu.memory_space<vmem>>, %arg3: memref<1x128xf32, #tpu.memory_space<vmem>>, %arg4: memref<256x128xbf16, #tpu.memory_space<vmem>>, %arg5: memref<256x128xf32, #tpu.memory_space<vmem>>) attributes {dimension_semantics = [#tpu.dimension_semantics<parallel>], iteration_bounds = array<i64: 1>, scalar_prefetch = 0 : i64, scratch_operands = 0 : i64, tpu.core_type = #tpu.core_type<tc>, window_params = [{transform_indices = @transform_0, window_bounds = array<i64: 256, 32>}, {pipeline_mode = #tpu.pipeline_mode<synchronous>, transform_indices = @transform_1, window_bounds = array<i64: 32, 256>}, {pipeline_mode = #tpu.pipeline_mode<synchronous>, transform_indices = @transform_2, window_bounds = array<i64: 1, 128>}, {transform_indices = @transform_3, window_bounds = array<i64: 256, 128>}, {transform_indices = @transform_4, window_bounds = array<i64: 256, 128>}]} {
    %c0 = arith.constant 0 : index
    %c0_0 = arith.constant 0 : index
    %0 = vector.load %arg1[%c0, %c0_0] : memref<256x32xbf16, #tpu.memory_space<vmem>>, vector<256x32xbf16>
    %c0_1 = arith.constant 0 : index
    %c0_2 = arith.constant 0 : index
    %1 = vector.load %arg2[%c0_1, %c0_2] : memref<32x256xbf16, #tpu.memory_space<vmem>>, vector<32x256xbf16>
    %cst = arith.constant dense<0.000000e+00> : vector<256x256xf32>
    %2 = tpu.matmul %0, %1, %cst {dimension_numbers = #tpu.dot_dimension_numbers<[1], [0], [0], [1], [0, 0, 1, 1], [], []>} : vector<256x32xbf16>, vector<32x256xbf16>, vector<256x256xf32> -> vector<256x256xf32>
    %3 = vector.extract_strided_slice %2 {offsets = [0, 0], sizes = [256, 128], strides = [1, 1]} : vector<256x256xf32> to vector<256x128xf32>
    %4 = arith.truncf %3 : vector<256x128xf32> to vector<256x128xbf16>
    %c0_3 = arith.constant 0 : index
    %c0_4 = arith.constant 0 : index
    %5 = vector.load %arg4[%c0_3, %c0_4] : memref<256x128xbf16, #tpu.memory_space<vmem>>, vector<256x128xbf16>
    tpu.vector_store %arg4[%c0_3, %c0_4], %4 {strides = array<i32>} : memref<256x128xbf16, #tpu.memory_space<vmem>>, vector<256x128xbf16>,
    %6 = vector.extract_strided_slice %2 {offsets = [0, 128], sizes = [256, 128], strides = [1, 1]} : vector<256x256xf32> to vector<256x128xf32>
    %c0_5 = arith.constant 0 : index
    %c0_6 = arith.constant 0 : index
    %7 = vector.load %arg3[%c0_5, %c0_6] : memref<1x128xf32, #tpu.memory_space<vmem>>, vector<1x128xf32>
    %8 = vector.broadcast %7 : vector<1x128xf32> to vector<256x128xf32>
    %9 = arith.addf %6, %8 : vector<256x128xf32>
    %c0_7 = arith.constant 0 : index
    %c0_8 = arith.constant 0 : index
    %10 = vector.load %arg5[%c0_7, %c0_8] : memref<256x128xf32, #tpu.memory_space<vmem>>, vector<256x128xf32>
    tpu.vector_store %arg5[%c0_7, %c0_8], %9 {strides = array<i32>} : memref<256x128xf32, #tpu.memory_space<vmem>>, vector<256x128xf32>,
    return
  }
  func.func @transform_0(%arg0: i32) -> (i32, i32) {
    %c0_i32 = arith.constant 0 : i32
    %c0_i32_0 = arith.constant 0 : i32
    return %arg0, %c0_i32 : i32, i32
  }
  func.func @transform_1(%arg0: i32) -> (i32, i32) {
    %c0_i32 = arith.constant 0 : i32
    %c0_i32_0 = arith.constant 0 : i32
    %c0_i32_1 = arith.constant 0 : i32
    return %c0_i32, %c0_i32_0 : i32, i32
  }
  func.func @transform_2(%arg0: i32) -> (i32, i32) {
    %c0_i32 = arith.constant 0 : i32
    %c0_i32_0 = arith.constant 0 : i32
    %c0_i32_1 = arith.constant 0 : i32
    return %c0_i32, %c0_i32_0 : i32, i32
  }
  func.func @transform_3(%arg0: i32) -> (i32, i32) {
    %c0_i32 = arith.constant 0 : i32
    %c0_i32_0 = arith.constant 0 : i32
    return %arg0, %c0_i32 : i32, i32
  }
  func.func @transform_4(%arg0: i32) -> (i32, i32) {
    %c0_i32 = arith.constant 0 : i32
    %c0_i32_0 = arith.constant 0 : i32
    return %arg0, %c0_i32 : i32, i32
  }
}

</mosaic_0001>

<llo_original>
// kernel: tpu_custom_call.1
$region0: #{tpu_custom_call.1}
  #allocation0 [shape = 'u32[]', space=smem, size = 0x4, offset = 0x4, fixed_abs, tag = 'smem constant byte address 0x4 - core index']
  #allocation1 [shape = 'u32[144,128]{1,0:T(1,128)}', space=vmem, size = 0x12000, scoped, tag = 'internal scratch']
  %s0 = inlined_call_operand.vmem [shape: bf16[256,32], index: 0, kind: input, shape index: {}]
  %s1 = inlined_call_operand.vmem [shape: bf16[32,256], index: 1, kind: input, shape index: {}]
  %s2 = inlined_call_operand.vmem [shape: f32[1,128], index: 2, kind: input, shape index: {}]
  %s3 = inlined_call_operand.hbm [shape: bf16[256,128], index: 3, kind: output, shape index: {0}]
  %s4 = inlined_call_operand.hbm [shape: f32[256,128], index: 4, kind: output, shape index: {1}]
  %5 = xla_tuple %s3, %s4
  %s6 = sld [smem:[#allocation0]]
  $region30: #{tpu_custom_call.1} parent=0
    _
  %s8 = ssub.s32 1, %s6
  %s9 = scalar_select 0, %s8, %s6
  $region1: #{tpu_custom_call.1} parent=0
    #allocation2 [shape = 'u8[65536]{0}', space=vmem, size = 0x10000, scoped, tag = 'output window, operand 0, single buffered']
    #allocation3 [shape = 's32[1]{0}', space=sflag, size = 0x4, scoped, tag = 'scoped memory for tpu_custom_call.1']
    #allocation4 [shape = 'u8[131072]{0}', space=vmem, size = 0x20000, scoped, tag = 'output window, operand 1, single buffered']
    #allocation5 [shape = 's32[1]{0}', space=sflag, size = 0x4, scoped, tag = 'scoped memory for tpu_custom_call.1']
    %10 = vsyncpa [#allocation3], 0
    %11 = vsyncpa [#allocation5], 0
    // Predicated region
    $region2: #{tpu_custom_call.1} parent=1 // pred_check
      _
    $region3: #{tpu_custom_call.1} parent=1 // pred_check_branch
      %13 = sbr.rel (0) target = $region5
    $region4: #{tpu_custom_call.1} parent=1 // pred_region
      _
    $region5: #{tpu_custom_call.1} parent=1 // pred_fallthru
      _
    // Predicated region
    $region6: #{tpu_custom_call.1} parent=1 // pred_check
      _
    $region7: #{tpu_custom_call.1} parent=1 // pred_check_branch
      %15 = sbr.rel (0) target = $region9
    $region8: #{tpu_custom_call.1} parent=1 // pred_region
      _
    $region9: #{tpu_custom_call.1} parent=1 // pred_fallthru
      _
    // Predicated region
    $region10: #{tpu_custom_call.1} parent=1 // pred_check
      _
    $region11: #{tpu_custom_call.1} parent=1 // pred_check_branch
      %17 = sbr.rel (0) target = $region13
    $region12: #{tpu_custom_call.1} parent=1 // pred_region
      _
    $region13: #{tpu_custom_call.1} parent=1 // pred_fallthru
      _
    %v19 = vld [vmem:[%s0] sm:$0xf]
    %v20 = vld [vmem:[%s0 + $0x4] sm:$0xf]
    %v21 = vld [vmem:[%s0 + $0x8] sm:$0xf]
    %v22 = vld [vmem:[%s0 + $0xc] sm:$0xf]
    %v23 = vld [vmem:[%s0 + $0x10] sm:$0xf]
    %v24 = vld [vmem:[%s0 + $0x14] sm:$0xf]
    %v25 = vld [vmem:[%s0 + $0x18] sm:$0xf]
    %v26 = vld [vmem:[%s0 + $0x1c] sm:$0xf]
    %v27 = vld [vmem:[%s0 + $0x20] sm:$0xf]
    %v28 = vld [vmem:[%s0 + $0x24] sm:$0xf]
    %v29 = vld [vmem:[%s0 + $0x28] sm:$0xf]
    %v30 = vld [vmem:[%s0 + $0x2c] sm:$0xf]
    %v31 = vld [vmem:[%s0 + $0x30] sm:$0xf]
    %v32 = vld [vmem:[%s0 + $0x34] sm:$0xf]
    %v33 = vld [vmem:[%s0 + $0x38] sm:$0xf]
    %v34 = vld [vmem:[%s0 + $0x3c] sm:$0xf]
    %v35 = vld [vmem:[%s0 + $0x40] sm:$0xf]
    %v36 = vld [vmem:[%s0 + $0x44] sm:$0xf]
    %v37 = vld [vmem:[%s0 + $0x48] sm:$0xf]
    %v38 = vld [vmem:[%s0 + $0x4c] sm:$0xf]
    %v39 = vld [vmem:[%s0 + $0x50] sm:$0xf]
    %v40 = vld [vmem:[%s0 + $0x54] sm:$0xf]
    %v41 = vld [vmem:[%s0 + $0x58] sm:$0xf]
    %v42 = vld [vmem:[%s0 + $0x5c] sm:$0xf]
    %v43 = vld [vmem:[%s0 + $0x60] sm:$0xf]
    %v44 = vld [vmem:[%s0 + $0x64] sm:$0xf]
    %v45 = vld [vmem:[%s0 + $0x68] sm:$0xf]
    %v46 = vld [vmem:[%s0 + $0x6c] sm:$0xf]
    %v47 = vld [vmem:[%s0 + $0x70] sm:$0xf]
    %v48 = vld [vmem:[%s0 + $0x74] sm:$0xf]
    %v49 = vld [vmem:[%s0 + $0x78] sm:$0xf]
    %v50 = vld [vmem:[%s0 + $0x7c] sm:$0xf]
    %v51 = vld [vmem:[%s1] sm:$0xff]
    %v52 = vld [vmem:[%s1 + $0x8] sm:$0xff]
    %v53 = vld [vmem:[%s1 + $0x10] sm:$0xff]
    %v54 = vld [vmem:[%s1 + $0x18] sm:$0xff]
    %v87 = vunpack.c.l.b16 %v19
    %v88 = vunpack.c.l.b16 %v20
    %v89 = vunpack.c.l.b16 %v21
    %v90 = vunpack.c.l.b16 %v22
    %v91 = vunpack.c.l.b16 %v23
    %v92 = vunpack.c.l.b16 %v24
    %v93 = vunpack.c.l.b16 %v25
    %v94 = vunpack.c.l.b16 %v26
    %v95 = vunpack.c.l.b16 %v27
    %v96 = vunpack.c.l.b16 %v28
    %v97 = vunpack.c.l.b16 %v29
    %v98 = vunpack.c.l.b16 %v30
    %v99 = vunpack.c.l.b16 %v31
    %v100 = vunpack.c.l.b16 %v32
    %v101 = vunpack.c.l.b16 %v33
    %v102 = vunpack.c.l.b16 %v34
    %v103 = vunpack.c.l.b16 %v35
    %v104 = vunpack.c.l.b16 %v36
    %v105 = vunpack.c.l.b16 %v37
    %v106 = vunpack.c.l.b16 %v38
    %v107 = vunpack.c.l.b16 %v39
    %v108 = vunpack.c.l.b16 %v40
    %v109 = vunpack.c.l.b16 %v41
    %v110 = vunpack.c.l.b16 %v42
    %v111 = vunpack.c.l.b16 %v43
    %v112 = vunpack.c.l.b16 %v44
    %v113 = vunpack.c.l.b16 %v45
    %v114 = vunpack.c.l.b16 %v46
    %v115 = vunpack.c.l.b16 %v47
    %v116 = vunpack.c.l.b16 %v48
    %v117 = vunpack.c.l.b16 %v49
    %v118 = vunpack.c.l.b16 %v50
    %v119 = vpack.c.b16 %v88, %v87
    %v120 = vpack.c.b16 %v90, %v89
    %v121 = vpack.c.b16 %v92, %v91
    %v122 = vpack.c.b16 %v94, %v93
    %v123 = vpack.c.b16 %v96, %v95
    %v124 = vpack.c.b16 %v98, %v97
    %v125 = vpack.c.b16 %v100, %v99
    %v126 = vpack.c.b16 %v102, %v101
    %v127 = vpack.c.b16 %v104, %v103
    %v128 = vpack.c.b16 %v106, %v105
    %v129 = vpack.c.b16 %v108, %v107
    %v130 = vpack.c.b16 %v110, %v109
    %v131 = vpack.c.b16 %v112, %v111
    %v132 = vpack.c.b16 %v114, %v113
    %v133 = vpack.c.b16 %v116, %v115
    %v134 = vpack.c.b16 %v118, %v117
    %v139 = vunpack.c.l.b16 %v51
    %v140 = vunpack.c.h.b16 %v51
    %v141 = vunpack.c.l.b16 %v52
    %v142 = vunpack.c.h.b16 %v52
    %v143 = vunpack.c.l.b16 %v53
    %v144 = vunpack.c.h.b16 %v53
    %v145 = vunpack.c.l.b16 %v54
    %v146 = vunpack.c.h.b16 %v54
    %v147 = vpack.c.b16 %v141, %v139
    %v148 = vpack.c.b16 %v142, %v140
    %v149 = vpack.c.b16 %v145, %v143
    %v150 = vpack.c.b16 %v146, %v144
    %vm155 = vcmask 261120
    %v157 = vsel %vm155, %v119, 0
    %v160 = vsel %vm155, %v120, 0
    %v163 = vsel %vm155, %v121, 0
    %v166 = vsel %vm155, %v122, 0
    %v169 = vsel %vm155, %v123, 0
    %v172 = vsel %vm155, %v124, 0
    %v175 = vsel %vm155, %v125, 0
    %v178 = vsel %vm155, %v126, 0
    %v181 = vsel %vm155, %v127, 0
    %v184 = vsel %vm155, %v128, 0
    %v187 = vsel %vm155, %v129, 0
    %v190 = vsel %vm155, %v130, 0
    %v193 = vsel %vm155, %v131, 0
    %v196 = vsel %vm155, %v132, 0
    %v199 = vsel %vm155, %v133, 0
    %v202 = vsel %vm155, %v134, 0
    %204 = vmatprep.subr.bf16.mxu0 %v148
    %205 = vmatpush1.bf16.msra.mxu0 %v147
    %206 = vmatprep.subr.bf16.mxu0 %v150
    %207 = vmatpush1.bf16.msra.mxu0 %v149
    %208 = vmatprep.subr.bf16.mxu0 0
    %209 = vmatpush1.bf16.msra.mxu0 0
    %210 = vmatprep.subr.bf16.mxu0 0
    %211 = vmatpush1.bf16.msra.mxu0 0
    %212 = vmatprep.subr.bf16.mxu0 0
    %213 = vmatpush1.bf16.msra.mxu0 0
    %214 = vmatprep.subr.bf16.mxu0 0
    %215 = vmatpush1.bf16.msra.mxu0 0
    %216 = vmatprep.subr.bf16.mxu0 0
    %217 = vmatpush1.bf16.msra.mxu0 0
    %218 = vmatprep.subr.bf16.mxu0 0
    %219 = vmatpush1.bf16.msra.mxu0 0
    %220 = vmatprep.subr.bf16.mxu0 0
    %221 = vmatpush1.bf16.msra.mxu0 0
    %222 = vmatprep.subr.bf16.mxu0 0
    %223 = vmatpush1.bf16.msra.mxu0 0
    %224 = vmatprep.subr.bf16.mxu0 0
    %225 = vmatpush1.bf16.msra.mxu0 0
    %226 = vmatprep.subr.bf16.mxu0 0
    %227 = vmatpush1.bf16.msra.mxu0 0
    %228 = vmatprep.subr.bf16.mxu0 0
    %229 = vmatpush1.bf16.msra.mxu0 0
    %230 = vmatprep.subr.bf16.mxu0 0
    %231 = vmatpush1.bf16.msra.mxu0 0
    %232 = vmatprep.subr.bf16.mxu0 0
    %233 = vmatpush1.bf16.msra.mxu0 0
    %234 = vmatprep.subr.bf16.mxu0 0
    %235 = vmatpush1.bf16.msra.mxu0 0
    %236 = vmatprep.mubr.bf16.mxu0 0
    %237 = vmatmul.mubr.bf16.gmra.mrb[0].mxu0 %v157
    %v238 = vpop.f32.mrb[0].mxu0
    %v239 = vadd.f32 0.0, %v238
    %v240 = vpop.f32.mrb[0].mxu0
    %v241 = vadd.f32 0.0, %v240
    %v242 = vpop.f32.mrb[0].mxu0
    %v243 = vadd.f32 0.0, %v242
    %v244 = vpop.f32.mrb[0].mxu0
    %v245 = vadd.f32 0.0, %v244
    %246 = vmatprep.mubr.bf16.mxu0 0
    %247 = vmatmul.mubr.bf16.gmra.mrb[0].mxu0 %v160
    %v248 = vpop.f32.mrb[0].mxu0
    %v249 = vadd.f32 0.0, %v248
    %v250 = vpop.f32.mrb[0].mxu0
    %v251 = vadd.f32 0.0, %v250
    %v252 = vpop.f32.mrb[0].mxu0
    %v253 = vadd.f32 0.0, %v252
    %v254 = vpop.f32.mrb[0].mxu0
    %v255 = vadd.f32 0.0, %v254
    %256 = vmatprep.mubr.bf16.mxu0 0
    %257 = vmatmul.mubr.bf16.gmra.mrb[0].mxu0 %v163
    %v258 = vpop.f32.mrb[0].mxu0
    %v259 = vadd.f32 0.0, %v258
    %v260 = vpop.f32.mrb[0].mxu0
    %v261 = vadd.f32 0.0, %v260
    %v262 = vpop.f32.mrb[0].mxu0
    %v263 = vadd.f32 0.0, %v262
    %v264 = vpop.f32.mrb[0].mxu0
    %v265 = vadd.f32 0.0, %v264
    %266 = vmatprep.mubr.bf16.mxu0 0
    %267 = vmatmul.mubr.bf16.gmra.mrb[0].mxu0 %v166
    %v268 = vpop.f32.mrb[0].mxu0
    %v269 = vadd.f32 0.0, %v268
    %v270 = vpop.f32.mrb[0].mxu0
    %v271 = vadd.f32 0.0, %v270
    %v272 = vpop.f32.mrb[0].mxu0
    %v273 = vadd.f32 0.0, %v272
    %v274 = vpop.f32.mrb[0].mxu0
    %v275 = vadd.f32 0.0, %v274
    %276 = vmatprep.mubr.bf16.mxu0 0
    %277 = vmatmul.mubr.bf16.gmra.mrb[0].mxu0 %v169
    %v278 = vpop.f32.mrb[0].mxu0
    %v279 = vadd.f32 0.0, %v278
    %v280 = vpop.f32.mrb[0].mxu0
    %v281 = vadd.f32 0.0, %v280
    %v282 = vpop.f32.mrb[0].mxu0
    %v283 = vadd.f32 0.0, %v282
    %v284 = vpop.f32.mrb[0].mxu0
    %v285 = vadd.f32 0.0, %v284
    %286 = vmatprep.mubr.bf16.mxu0 0
    %287 = vmatmul.mubr.bf16.gmra.mrb[0].mxu0 %v172
    %v288 = vpop.f32.mrb[0].mxu0
    %v289 = vadd.f32 0.0, %v288
    %v290 = vpop.f32.mrb[0].mxu0
    %v291 = vadd.f32 0.0, %v290
    %v292 = vpop.f32.mrb[0].mxu0
    %v293 = vadd.f32 0.0, %v292
    %v294 = vpop.f32.mrb[0].mxu0
    %v295 = vadd.f32 0.0, %v294
    %296 = vmatprep.mubr.bf16.mxu0 0
    %297 = vmatmul.mubr.bf16.gmra.mrb[0].mxu0 %v175
    %v298 = vpop.f32.mrb[0].mxu0
    %v299 = vadd.f32 0.0, %v298
    %v300 = vpop.f32.mrb[0].mxu0
    %v301 = vadd.f32 0.0, %v300
    %v302 = vpop.f32.mrb[0].mxu0
    %v303 = vadd.f32 0.0, %v302
    %v304 = vpop.f32.mrb[0].mxu0
    %v305 = vadd.f32 0.0, %v304
    %306 = vmatprep.mubr.bf16.mxu0 0
    %307 = vmatmul.mubr.bf16.gmra.mrb[0].mxu0 %v178
    %v308 = vpop.f32.mrb[0].mxu0
    %v309 = vadd.f32 0.0, %v308
    %v310 = vpop.f32.mrb[0].mxu0
    %v311 = vadd.f32 0.0, %v310
    %v312 = vpop.f32.mrb[0].mxu0
    %v313 = vadd.f32 0.0, %v312
    %v314 = vpop.f32.mrb[0].mxu0
    %v315 = vadd.f32 0.0, %v314
    %316 = vmatprep.mubr.bf16.mxu0 0
    %317 = vmatmul.mubr.bf16.gmra.mrb[0].mxu0 %v181
    %v318 = vpop.f32.mrb[0].mxu0
    %v319 = vadd.f32 0.0, %v318
    %v320 = vpop.f32.mrb[0].mxu0
    %v321 = vadd.f32 0.0, %v320
    %v322 = vpop.f32.mrb[0].mxu0
    %v323 = vadd.f32 0.0, %v322
    %v324 = vpop.f32.mrb[0].mxu0
    %v325 = vadd.f32 0.0, %v324
    %326 = vmatprep.mubr.bf16.mxu0 0
    %327 = vmatmul.mubr.bf16.gmra.mrb[0].mxu0 %v184
    %v328 = vpop.f32.mrb[0].mxu0
    %v329 = vadd.f32 0.0, %v328
    %v330 = vpop.f32.mrb[0].mxu0
    %v331 = vadd.f32 0.0, %v330
    %v332 = vpop.f32.mrb[0].mxu0
    %v333 = vadd.f32 0.0, %v332
    %v334 = vpop.f32.mrb[0].mxu0
    %v335 = vadd.f32 0.0, %v334
    %336 = vmatprep.mubr.bf16.mxu0 0
    %337 = vmatmul.mubr.bf16.gmra.mrb[0].mxu0 %v187
    %v338 = vpop.f32.mrb[0].mxu0
    %v339 = vadd.f32 0.0, %v338
    %v340 = vpop.f32.mrb[0].mxu0
    %v341 = vadd.f32 0.0, %v340
    %v342 = vpop.f32.mrb[0].mxu0
    %v343 = vadd.f32 0.0, %v342
    %v344 = vpop.f32.mrb[0].mxu0
    %v345 = vadd.f32 0.0, %v344
    %346 = vmatprep.mubr.bf16.mxu0 0
    %347 = vmatmul.mubr.bf16.gmra.mrb[0].mxu0 %v190
    %v348 = vpop.f32.mrb[0].mxu0
    %v349 = vadd.f32 0.0, %v348
    %v350 = vpop.f32.mrb[0].mxu0
    %v351 = vadd.f32 0.0, %v350
    %v352 = vpop.f32.mrb[0].mxu0
    %v353 = vadd.f32 0.0, %v352
    %v354 = vpop.f32.mrb[0].mxu0
    %v355 = vadd.f32 0.0, %v354
    %356 = vmatprep.mubr.bf16.mxu0 0
    %357 = vmatmul.mubr.bf16.gmra.mrb[0].mxu0 %v193
    %v358 = vpop.f32.mrb[0].mxu0
    %v359 = vadd.f32 0.0, %v358
    %v360 = vpop.f32.mrb[0].mxu0
    %v361 = vadd.f32 0.0, %v360
    %v362 = vpop.f32.mrb[0].mxu0
    %v363 = vadd.f32 0.0, %v362
    %v364 = vpop.f32.mrb[0].mxu0
    %v365 = vadd.f32 0.0, %v364
    %366 = vmatprep.mubr.bf16.mxu0 0
    %367 = vmatmul.mubr.bf16.gmra.mrb[0].mxu0 %v196
    %v368 = vpop.f32.mrb[0].mxu0
    %v369 = vadd.f32 0.0, %v368
    %v370 = vpop.f32.mrb[0].mxu0
    %v371 = vadd.f32 0.0, %v370
    %v372 = vpop.f32.mrb[0].mxu0
    %v373 = vadd.f32 0.0, %v372
    %v374 = vpop.f32.mrb[0].mxu0
    %v375 = vadd.f32 0.0, %v374
    %376 = vmatprep.mubr.bf16.mxu0 0
    %377 = vmatmul.mubr.bf16.gmra.mrb[0].mxu0 %v199
    %v378 = vpop.f32.mrb[0].mxu0
    %v379 = vadd.f32 0.0, %v378
    %v380 = vpop.f32.mrb[0].mxu0
    %v381 = vadd.f32 0.0, %v380
    %v382 = vpop.f32.mrb[0].mxu0
    %v383 = vadd.f32 0.0, %v382
    %v384 = vpop.f32.mrb[0].mxu0
    %v385 = vadd.f32 0.0, %v384
    %386 = vmatprep.mubr.bf16.mxu0 0
    %387 = vmatmul.mubr.bf16.gmra.mrb[0].mxu0 %v202
    %v388 = vpop.f32.mrb[0].mxu0
    %v389 = vadd.f32 0.0, %v388
    %v390 = vpop.f32.mrb[0].mxu0
    %v391 = vadd.f32 0.0, %v390
    %v392 = vpop.f32.mrb[0].mxu0
    %v393 = vadd.f32 0.0, %v392
    %v394 = vpop.f32.mrb[0].mxu0
    %v395 = vadd.f32 0.0, %v394
    %396 = vdwg.mxu0
    %v397 = vpack.c.bf16 %v243, %v239
    %v398 = vpack.c.bf16 %v253, %v249
    %v399 = vpack.c.bf16 %v263, %v259
    %v400 = vpack.c.bf16 %v273, %v269
    %v401 = vpack.c.bf16 %v283, %v279
    %v402 = vpack.c.bf16 %v293, %v289
    %v403 = vpack.c.bf16 %v303, %v299
    %v404 = vpack.c.bf16 %v313, %v309
    %v405 = vpack.c.bf16 %v323, %v319
    %v406 = vpack.c.bf16 %v333, %v329
    %v407 = vpack.c.bf16 %v343, %v339
    %v408 = vpack.c.bf16 %v353, %v349
    %v409 = vpack.c.bf16 %v363, %v359
    %v410 = vpack.c.bf16 %v373, %v369
    %v411 = vpack.c.bf16 %v383, %v379
    %v412 = vpack.c.bf16 %v393, %v389
    %v429 = vunpack.c.l.b16 %v397
    %v430 = vunpack.c.h.b16 %v397
    %v431 = vunpack.c.l.b16 %v398
    %v432 = vunpack.c.h.b16 %v398
    %v433 = vunpack.c.l.b16 %v399
    %v434 = vunpack.c.h.b16 %v399
    %v435 = vunpack.c.l.b16 %v400
    %v436 = vunpack.c.h.b16 %v400
    %v437 = vunpack.c.l.b16 %v401
    %v438 = vunpack.c.h.b16 %v401
    %v439 = vunpack.c.l.b16 %v402
    %v440 = vunpack.c.h.b16 %v402
    %v441 = vunpack.c.l.b16 %v403
    %v442 = vunpack.c.h.b16 %v403
    %v443 = vunpack.c.l.b16 %v404
    %v444 = vunpack.c.h.b16 %v404
    %v445 = vunpack.c.l.b16 %v405
    %v446 = vunpack.c.h.b16 %v405
    %v447 = vunpack.c.l.b16 %v406
    %v448 = vunpack.c.h.b16 %v406
    %v449 = vunpack.c.l.b16 %v407
    %v450 = vunpack.c.h.b16 %v407
    %v451 = vunpack.c.l.b16 %v408
    %v452 = vunpack.c.h.b16 %v408
    %v453 = vunpack.c.l.b16 %v409
    %v454 = vunpack.c.h.b16 %v409
    %v455 = vunpack.c.l.b16 %v410
    %v456 = vunpack.c.h.b16 %v410
    %v457 = vunpack.c.l.b16 %v411
    %v458 = vunpack.c.h.b16 %v411
    %v459 = vunpack.c.l.b16 %v412
    %v460 = vunpack.c.h.b16 %v412
    %v461 = vpack.c.b16 %v429, %v429
    %v462 = vpack.c.b16 %v430, %v430
    %v463 = vpack.c.b16 %v431, %v431
    %v464 = vpack.c.b16 %v432, %v432
    %v465 = vpack.c.b16 %v433, %v433
    %v466 = vpack.c.b16 %v434, %v434
    %v467 = vpack.c.b16 %v435, %v435
    %v468 = vpack.c.b16 %v436, %v436
    %v469 = vpack.c.b16 %v437, %v437
    %v470 = vpack.c.b16 %v438, %v438
    %v471 = vpack.c.b16 %v439, %v439
    %v472 = vpack.c.b16 %v440, %v440
    %v473 = vpack.c.b16 %v441, %v441
    %v474 = vpack.c.b16 %v442, %v442
    %v475 = vpack.c.b16 %v443, %v443
    %v476 = vpack.c.b16 %v444, %v444
    %v477 = vpack.c.b16 %v445, %v445
    %v478 = vpack.c.b16 %v446, %v446
    %v479 = vpack.c.b16 %v447, %v447
    %v480 = vpack.c.b16 %v448, %v448
    %v481 = vpack.c.b16 %v449, %v449
    %v482 = vpack.c.b16 %v450, %v450
    %v483 = vpack.c.b16 %v451, %v451
    %v484 = vpack.c.b16 %v452, %v452
    %v485 = vpack.c.b16 %v453, %v453
    %v486 = vpack.c.b16 %v454, %v454
    %v487 = vpack.c.b16 %v455, %v455
    %v488 = vpack.c.b16 %v456, %v456
    %v489 = vpack.c.b16 %v457, %v457
    %v490 = vpack.c.b16 %v458, %v458
    %v491 = vpack.c.b16 %v459, %v459
    %v492 = vpack.c.b16 %v460, %v460
    %525 = vst [vmem:[#allocation2] sm:$0xf] %v461
    %526 = vst [vmem:[#allocation2 + $0x4] sm:$0xf] %v462
    %527 = vst [vmem:[#allocation2 + $0x8] sm:$0xf] %v463
    %528 = vst [vmem:[#allocation2 + $0xc] sm:$0xf] %v464
    %529 = vst [vmem:[#allocation2 + $0x10] sm:$0xf] %v465
    %530 = vst [vmem:[#allocation2 + $0x14] sm:$0xf] %v466
    %531 = vst [vmem:[#allocation2 + $0x18] sm:$0xf] %v467
    %532 = vst [vmem:[#allocation2 + $0x1c] sm:$0xf] %v468
    %533 = vst [vmem:[#allocation2 + $0x20] sm:$0xf] %v469
    %534 = vst [vmem:[#allocation2 + $0x24] sm:$0xf] %v470
    %535 = vst [vmem:[#allocation2 + $0x28] sm:$0xf] %v471
    %536 = vst [vmem:[#allocation2 + $0x2c] sm:$0xf] %v472
    %537 = vst [vmem:[#allocation2 + $0x30] sm:$0xf] %v473
    %538 = vst [vmem:[#allocation2 + $0x34] sm:$0xf] %v474
    %539 = vst [vmem:[#allocation2 + $0x38] sm:$0xf] %v475
    %540 = vst [vmem:[#allocation2 + $0x3c] sm:$0xf] %v476
    %541 = vst [vmem:[#allocation2 + $0x40] sm:$0xf] %v477
    %542 = vst [vmem:[#allocation2 + $0x44] sm:$0xf] %v478
    %543 = vst [vmem:[#allocation2 + $0x48] sm:$0xf] %v479
    %544 = vst [vmem:[#allocation2 + $0x4c] sm:$0xf] %v480
    %545 = vst [vmem:[#allocation2 + $0x50] sm:$0xf] %v481
    %546 = vst [vmem:[#allocation2 + $0x54] sm:$0xf] %v482
    %547 = vst [vmem:[#allocation2 + $0x58] sm:$0xf] %v483
    %548 = vst [vmem:[#allocation2 + $0x5c] sm:$0xf] %v484
    %549 = vst [vmem:[#allocation2 + $0x60] sm:$0xf] %v485
    %550 = vst [vmem:[#allocation2 + $0x64] sm:$0xf] %v486
    %551 = vst [vmem:[#allocation2 + $0x68] sm:$0xf] %v487
    %552 = vst [vmem:[#allocation2 + $0x6c] sm:$0xf] %v488
    %553 = vst [vmem:[#allocation2 + $0x70] sm:$0xf] %v489
    %554 = vst [vmem:[#allocation2 + $0x74] sm:$0xf] %v490
    %555 = vst [vmem:[#allocation2 + $0x78] sm:$0xf] %v491
    %556 = vst [vmem:[#allocation2 + $0x7c] sm:$0xf] %v492
    %v557 = vld [vmem:[%s2] sm:$0x1]
    %v559 = vlaneseq
    %v560 = vshrl.u32 %v559, 7
    %v561 = vsub.s32 0, %v560
    %v562 = vrot.slane %v557, %v561
    %v564 = vadd.f32 %v241, %v562
    %v565 = vadd.f32 %v245, %v562
    %v566 = vadd.f32 %v251, %v562
    %v567 = vadd.f32 %v255, %v562
    %v568 = vadd.f32 %v261, %v562
    %v569 = vadd.f32 %v265, %v562
    %v570 = vadd.f32 %v271, %v562
    %v571 = vadd.f32 %v275, %v562
    %v572 = vadd.f32 %v281, %v562
    %v573 = vadd.f32 %v285, %v562
    %v574 = vadd.f32 %v291, %v562
    %v575 = vadd.f32 %v295, %v562
    %v576 = vadd.f32 %v301, %v562
    %v577 = vadd.f32 %v305, %v562
    %v578 = vadd.f32 %v311, %v562
    %v579 = vadd.f32 %v315, %v562
    %v580 = vadd.f32 %v321, %v562
    %v581 = vadd.f32 %v325, %v562
    %v582 = vadd.f32 %v331, %v562
    %v583 = vadd.f32 %v335, %v562
    %v584 = vadd.f32 %v341, %v562
    %v585 = vadd.f32 %v345, %v562
    %v586 = vadd.f32 %v351, %v562
    %v587 = vadd.f32 %v355, %v562
    %v588 = vadd.f32 %v361, %v562
    %v589 = vadd.f32 %v365, %v562
    %v590 = vadd.f32 %v371, %v562
    %v591 = vadd.f32 %v375, %v562
    %v592 = vadd.f32 %v381, %v562
    %v593 = vadd.f32 %v385, %v562
    %v594 = vadd.f32 %v391, %v562
    %v595 = vadd.f32 %v395, %v562
    %596 = vst [vmem:[#allocation4] sm:$0xff] %v564
    %597 = vst [vmem:[#allocation4 + $0x8] sm:$0xff] %v565
    %598 = vst [vmem:[#allocation4 + $0x10] sm:$0xff] %v566
    %599 = vst [vmem:[#allocation4 + $0x18] sm:$0xff] %v567
    %600 = vst [vmem:[#allocation4 + $0x20] sm:$0xff] %v568
    %601 = vst [vmem:[#allocation4 + $0x28] sm:$0xff] %v569
    %602 = vst [vmem:[#allocation4 + $0x30] sm:$0xff] %v570
    %603 = vst [vmem:[#allocation4 + $0x38] sm:$0xff] %v571
    %604 = vst [vmem:[#allocation4 + $0x40] sm:$0xff] %v572
    %605 = vst [vmem:[#allocation4 + $0x48] sm:$0xff] %v573
    %606 = vst [vmem:[#allocation4 + $0x50] sm:$0xff] %v574
    %607 = vst [vmem:[#allocation4 + $0x58] sm:$0xff] %v575
    %608 = vst [vmem:[#allocation4 + $0x60] sm:$0xff] %v576
    %609 = vst [vmem:[#allocation4 + $0x68] sm:$0xff] %v577
    %610 = vst [vmem:[#allocation4 + $0x70] sm:$0xff] %v578
    %611 = vst [vmem:[#allocation4 + $0x78] sm:$0xff] %v579
    %612 = vst [vmem:[#allocation4 + $0x80] sm:$0xff] %v580
    %613 = vst [vmem:[#allocation4 + $0x88] sm:$0xff] %v581
    %614 = vst [vmem:[#allocation4 + $0x90] sm:$0xff] %v582
    %615 = vst [vmem:[#allocation4 + $0x98] sm:$0xff] %v583
    %616 = vst [vmem:[#allocation4 + $0xa0] sm:$0xff] %v584
    %617 = vst [vmem:[#allocation4 + $0xa8] sm:$0xff] %v585
    %618 = vst [vmem:[#allocation4 + $0xb0] sm:$0xff] %v586
    %619 = vst [vmem:[#allocation4 + $0xb8] sm:$0xff] %v587
    %620 = vst [vmem:[#allocation4 + $0xc0] sm:$0xff] %v588
    %621 = vst [vmem:[#allocation4 + $0xc8] sm:$0xff] %v589
    %622 = vst [vmem:[#allocation4 + $0xd0] sm:$0xff] %v590
    %623 = vst [vmem:[#allocation4 + $0xd8] sm:$0xff] %v591
    %624 = vst [vmem:[#allocation4 + $0xe0] sm:$0xff] %v592
    %625 = vst [vmem:[#allocation4 + $0xe8] sm:$0xff] %v593
    %626 = vst [vmem:[#allocation4 + $0xf0] sm:$0xff] %v594
    %627 = vst [vmem:[#allocation4 + $0xf8] sm:$0xff] %v595
    // Predicated region
    $region14: #{tpu_custom_call.1} parent=1 // pred_check
      _
    $region15: #{tpu_custom_call.1} parent=1 // pred_check_branch
      %629 = sbr.rel (0) target = $region17
    $region16: #{tpu_custom_call.1} parent=1 // pred_region
      %s631 = ssub.s32 2048, 2048
      %632 = vsyncadd [#allocation3], %s631
      %s633 = sshll.u32 [#allocation2], 4
      %s634 = int_to_ptr.vmem [resolvable:$true] %s633
      %639 = dma.vmem_to_hbm [thread:$0]  %s634, 2048, %s3, [#allocation3], 64, 64, 4
    $region17: #{tpu_custom_call.1} parent=1 // pred_fallthru
      _
    // Predicated region
    $region18: #{tpu_custom_call.1} parent=1 // pred_check
      _
    $region19: #{tpu_custom_call.1} parent=1 // pred_check_branch
      %641 = sbr.rel (0) target = $region21
    $region20: #{tpu_custom_call.1} parent=1 // pred_region
      %s643 = ssub.s32 4096, 4096
      %644 = vsyncadd [#allocation5], %s643
      %s645 = sshll.u32 [#allocation4], 4
      %s646 = int_to_ptr.vmem [resolvable:$true] %s645
      %651 = dma.vmem_to_hbm [thread:$0]  %s646, 4096, %s4, [#allocation5], 128, 128, 8
    $region21: #{tpu_custom_call.1} parent=1 // pred_fallthru
      _
    // Predicated region
    $region22: #{tpu_custom_call.1} parent=1 // pred_check
      _
    $region23: #{tpu_custom_call.1} parent=1 // pred_check_branch
      %653 = sbr.rel (0) target = $region25
    $region24: #{tpu_custom_call.1} parent=1 // pred_region
      %654 = dma.done [#allocation3], 2048
    $region25: #{tpu_custom_call.1} parent=1 // pred_fallthru
      _
    // Predicated region
    $region26: #{tpu_custom_call.1} parent=1 // pred_check
      _
    $region27: #{tpu_custom_call.1} parent=1 // pred_check_branch
      %656 = sbr.rel (0) target = $region29
    $region28: #{tpu_custom_call.1} parent=1 // pred_region
      %657 = dma.done [#allocation5], 4096
    $region29: #{tpu_custom_call.1} parent=1 // pred_fallthru
      _
    %658 = vsyncpa [#allocation3], 1
    %659 = vsyncpa [#allocation5], 1

</llo_original>
